<compile_context>
chip_gen: v5e
topology: v5e:2x2
jax: 0.10.0
libtpu: 0.0.40
codegen_flags: <defaults>
</compile_context>

<pallas_src>
import jax
import jax.numpy as jnp
from jax.experimental import pallas as pl
from jax.experimental.pallas import tpu as pltpu

BN_EPS = 1e-5


def _softplus(x):
    # Numerically stable softplus, matches F.softplus(beta=1).
    return jnp.maximum(x, 0.0) + jnp.log1p(jnp.exp(-jnp.abs(x)))


def prodlda_kernel(
    x_ref,
    w1_ref, b1_ref,
    w2_ref, b2_ref,
    wmulv_ref, bmulv_ref,
    wd_ref, bd_ref,
    logp_ref, mulv_ref,
):
    cdt = w1_ref.dtype  # MXU operand dtype (bf16); accumulation stays f32

    x = x_ref[...]  # already bf16 (cast in the wrapper) -> no in-kernel cast

    # ---- Encoder ----
    h1 = _softplus(
        jnp.dot(x, w1_ref[...], preferred_element_type=jnp.float32) + b1_ref[...]
    )
    h2 = _softplus(
        jnp.dot(h1.astype(cdt), w2_ref[...], preferred_element_type=jnp.float32)
        + b2_ref[...]
    )

    # Fused, lane-padded mu|lv projection; BN already folded into weights/bias.
    mulv = (
        jnp.dot(h2.astype(cdt), wmulv_ref[...], preferred_element_type=jnp.float32)
        + bmulv_ref[...]
    )
    mulv_ref[...] = mulv  # lane-dense (TB, 2*Kp) store

    Kp = mulv.shape[1] // 2          # multiple of 128 -> tile-aligned slices
    mu = mulv[:, :Kp]
    lv = mulv[:, Kp:]

    # ---- LogNormal(mu, exp(0.5*lv)).mean = exp(mu + 0.5*exp(lv)), normalized.
    # Padded topics have mu = -1e30 -> t_pad = 0 (no effect on sum / decoder).
    t = jnp.exp(mu + 0.5 * jnp.exp(lv))
    t = t * pl.reciprocal(jnp.sum(t, axis=1, keepdims=True), approx=True)

    # ---- Decoder (eval: dropout = identity; BN folded into wd/bd) ----
    logits = (
        jnp.dot(t.astype(cdt), wd_ref[...], preferred_element_type=jnp.float32)
        + bd_ref[...]
    )
    m = jnp.max(logits, axis=1, keepdims=True)
    z = logits - m
    # Store the shifted logits first, then subtract logsumexp in place: fewer
    # live (TB, V) f32 temporaries in the epilogue.
    logp_ref[...] = z.astype(logp_ref.dtype)
    lse = jnp.log(jnp.sum(jnp.exp(z), axis=1, keepdims=True))
    logp_ref[...] = (logp_ref[...].astype(jnp.float32) - lse).astype(logp_ref.dtype)


def _vmem_limit_bytes():
    # 75% of physical VMEM leaves headroom for compiler scratch.
    # Fallback is 128 MiB (v5e/v6e physical); v7x reports 64 MiB via get_tpu_info.
    cap = None
    try:
        cap = getattr(pltpu.get_tpu_info(), "vmem_capacity_bytes", None)
    except Exception:
        cap = None
    if not cap:
        cap = 128 << 20
    return int(cap) * 3 // 4


def _batch_tile(B, per_row_bytes, resident_bytes, vmem_budget):
    """Fixed batch tile sized against the VMEM budget; used with a cdiv grid."""
    if B <= 8:
        return B  # block's second-to-last dim == full array dim (layout-legal)
    avail = max(vmem_budget - resident_bytes, 4 << 20)
    tb = int(avail // max(per_row_bytes, 1))
    tb = max(8, min(256, (tb // 8) * 8))
    # Guarantee >= 2 grid steps so the "parallel" batch axis shards across both
    # v7x TensorCores and the x/logp streams stay double-buffered.
    half = max(8, ((B + 15) // 16) * 8)  # ~ round_up(ceil(B/2), 8)
    return int(min(tb, half))


def prodlda_forward(x, prep, *, logp_dtype=jnp.float32):
    B, V = x.shape
    H = prep["w1"].shape[1]
    K2p = prep["wmulv"].shape[1]
    Kp = K2p // 2
    K = int(prep["num_topics"])

    cdt = prep["w1"].dtype
    x = x.astype(cdt)  # stream x as bf16 (halves the input HBM bytes)

    weight_args = (
        prep["w1"], prep["b1"],
        prep["w2"], prep["b2"],
        prep["wmulv"], prep["bmulv"],
        prep["wd"], prep["bd"],
    )
    weight_bytes = int(sum(a.size * a.dtype.itemsize for a in weight_args))

    logp_itemsize = jnp.dtype(logp_dtype).itemsize
    # Per batch-row VMEM bytes: double-buffered x (bf16) + logp + mulv streams
    # plus the dominant f32 temporaries (logits/z/exp) and h1/h2/t.
    per_row = (
        2 * V * 2                 # x, 2 buffers, bf16
        + 2 * V * logp_itemsize   # logp, 2 buffers
        + 2 * K2p * 4             # mulv, 2 buffers
        + 3 * V * 4               # logits / z / exp(z) f32 temporaries
        + 2 * H * 4 + 2 * K2p * 4 # h1, h2, mu/lv/t
    )

    vmem_budget = _vmem_limit_bytes()
    TB = _batch_tile(B, per_row, 2 * weight_bytes, vmem_budget)
    nb = pl.cdiv(B, TB)

    in_specs = [pl.BlockSpec((TB, V), lambda i: (i, 0))]
    # Weights/biases: full-array blocks, constant index -> stay VMEM-resident.
    in_specs += [pl.BlockSpec(a.shape, lambda i: (0, 0)) for a in weight_args]

    out_specs = (
        pl.BlockSpec((TB, V), lambda i: (i, 0)),
        pl.BlockSpec((TB, K2p), lambda i: (i, 0)),
    )

    flops = 2 * B * (V * H + H * H + H * K2p + Kp * V)
    transcendentals = B * (4 * H + 2 * K2p + V + 2)
    bytes_accessed = int(
        x.size * x.dtype.itemsize
        + weight_bytes
        + B * V * logp_itemsize
        + B * K2p * 4
    )

    logp, mulv = pl.pallas_call(
        prodlda_kernel,
        out_shape=(
            jax.ShapeDtypeStruct((B, V), logp_dtype),    # log_softmax outputs
            jax.ShapeDtypeStruct((B, K2p), jnp.float32),  # packed [mu | logvar], lane-padded
        ),
        grid=(nb,),
        in_specs=in_specs,
        out_specs=out_specs,
        compiler_params=pltpu.CompilerParams(
            dimension_semantics=("parallel",),
            vmem_limit_bytes=int(vmem_budget),
        ),
        cost_estimate=pl.CostEstimate(
            flops=int(flops),
            transcendentals=int(transcendentals),
            bytes_accessed=bytes_accessed,
        ),
    )(x, *weight_args)

    mu = mulv[:, :K]
    lv = mulv[:, Kp:Kp + K]
    return logp, mu, lv


def init_params(key, vocab_size, hidden_size, num_topics):
    """PyTorch-layout f32 params (Linear weights pre-transposed, BN packed)."""
    ks = jax.random.split(key, 5)
    s = 0.02

    def bn_pack(feat):
        return jnp.stack(
            [
                jnp.ones((feat,), jnp.float32),   # gamma
                jnp.zeros((feat,), jnp.float32),  # beta
                jnp.zeros((feat,), jnp.float32),  # running_mean
                jnp.ones((feat,), jnp.float32),   # running_var
            ],
            axis=0,
        )

    return {
        "w1t": s * jax.random.normal(ks[0], (vocab_size, hidden_size), jnp.float32),
        "b1": jnp.zeros((1, hidden_size), jnp.float32),
        "w2t": s * jax.random.normal(ks[1], (hidden_size, hidden_size), jnp.float32),
        "b2": jnp.zeros((1, hidden_size), jnp.float32),
        "wmut": s * jax.random.normal(ks[2], (hidden_size, num_topics), jnp.float32),
        "bmu": jnp.zeros((1, num_topics), jnp.float32),
        "wlvt": s * jax.random.normal(ks[3], (hidden_size, num_topics), jnp.float32),
        "blv": jnp.zeros((1, num_topics), jnp.float32),
        "bnmu": bn_pack(num_topics),
        "bnlv": bn_pack(num_topics),
        "wdt": s * jax.random.normal(ks[4], (num_topics, vocab_size), jnp.float32),
        "bd": jnp.zeros((1, vocab_size), jnp.float32),
        "bnd": bn_pack(vocab_size),
    }


def prepare_params(p, compute_dtype=jnp.bfloat16):
    """One-time param prep: fold eval-mode BN into the preceding Linear, fuse
    and lane-pad the mu/lv projections, zero-row-pad the decoder weights, and
    cast weights to the MXU compute dtype (biases stay f32)."""

    def fold(w_t, b, bn):
        gamma, beta, rmean, rvar = bn[0], bn[1], bn[2], bn[3]
        s = gamma * jax.lax.rsqrt(rvar + BN_EPS)
        return w_t * s[None, :], b * s[None, :] + (beta - rmean * s)[None, :]

    wmu, bmu = fold(p["wmut"], p["bmu"], p["bnmu"])
    wlv, blv = fold(p["wlvt"], p["blv"], p["bnlv"])
    wd, bd = fold(p["wdt"], p["bd"], p["bnd"])

    H, K = wmu.shape
    Kp = max(128, ((K + 127) // 128) * 128)  # lane-tile aligned half-width

    def pad_cols(w, b, cols, pad_bias):
        wp = jnp.zeros((w.shape[0], cols), w.dtype).at[:, :w.shape[1]].set(w)
        bp = jnp.full((1, cols), pad_bias, b.dtype).at[:, :b.shape[1]].set(b)
        return wp, bp

    # Padded mu columns get a huge negative bias so exp(mu + 0.5*exp(lv)) == 0
    # for padded topics (they never touch the mixture sum or decoder output).
    wmu_p, bmu_p = pad_cols(wmu, bmu, Kp, -1e30)
    wlv_p, blv_p = pad_cols(wlv, blv, Kp, 0.0)
    wd_p = jnp.zeros((Kp, wd.shape[1]), wd.dtype).at[:K, :].set(wd)

    cd = compute_dtype
    return {
        "num_topics": K,
        "w1": p["w1t"].astype(cd),
        "b1": p["b1"],
        "w2": p["w2t"].astype(cd),
        "b2": p["b2"],
        "wmulv": jnp.concatenate([wmu_p, wlv_p], axis=1).astype(cd),
        "bmulv": jnp.concatenate([bmu_p, blv_p], axis=1),
        "wd": wd_p.astype(cd),
        "bd": bd,
    }


def prodlda_reference(x, p):
    """Pure-JAX f32 reference mirroring the PyTorch eval-mode forward."""
    def bn(v, q):
        return (v - q[2]) / jnp.sqrt(q[3] + BN_EPS) * q[0] + q[1]

    h1 = jnp.logaddexp(x @ p["w1t"] + p["b1"], 0.0)
    h2 = jnp.logaddexp(h1 @ p["w2t"] + p["b2"], 0.0)
    mu = bn(h2 @ p["wmut"] + p["bmu"], p["bnmu"])
    lv = bn(h2 @ p["wlvt"] + p["blv"], p["bnlv"])
    t = jnp.exp(mu + 0.5 * jnp.exp(lv))
    t = t / jnp.sum(t, axis=1, keepdims=True)
    logits = bn(t @ p["wdt"] + p["bd"], p["bnd"])
    logp = jax.nn.log_softmax(logits, axis=1)
    return logp, mu, lv


if __name__ == "__main__":
    # Small shapes consistent with the module: bag-of-words input (B, vocab)
    B, VOCAB, HIDDEN, TOPICS = 8, 256, 128, 32

    key = jax.random.PRNGKey(0)
    k_x, k_p = jax.random.split(key)

    # Non-negative "word count" style input
    x = jax.random.uniform(k_x, (B, VOCAB), jnp.float32) * 3.0
    params = init_params(k_p, VOCAB, HIDDEN, TOPICS)
    prep = prepare_params(params)   # fold BN + fuse/pad mu|lv + bf16 weights

    logp, mu, lv = jax.block_until_ready(prodlda_forward(x, prep))

    # Correctness vs. full-f32 reference; tolerance accounts for bf16
    # weights/activations on the matmuls and the approx (EUP) reciprocal.
    ref_logp, ref_mu, ref_lv = prodlda_reference(x, params)
    assert jnp.allclose(logp, ref_logp, atol=1e-2, rtol=1e-2), float(
        jnp.max(jnp.abs(logp - ref_logp))
    )
    assert jnp.allclose(mu, ref_mu, atol=1e-2, rtol=1e-2), float(
        jnp.max(jnp.abs(mu - ref_mu))
    )
    assert jnp.allclose(lv, ref_lv, atol=1e-2, rtol=1e-2), float(
        jnp.max(jnp.abs(lv - ref_lv))
    )

    print("KERNEL_OK")
</pallas_src>

<mosaic_0001>
module attributes {stable_mosaic.version = 11 : i64} {
  func.func @prodlda_kernel(%arg0: i32, %arg1: memref<8x256xbf16, #tpu.memory_space<vmem>>, %arg2: memref<256x128xbf16, #tpu.memory_space<vmem>>, %arg3: memref<1x128xf32, #tpu.memory_space<vmem>>, %arg4: memref<128x128xbf16, #tpu.memory_space<vmem>>, %arg5: memref<1x128xf32, #tpu.memory_space<vmem>>, %arg6: memref<128x256xbf16, #tpu.memory_space<vmem>>, %arg7: memref<1x256xf32, #tpu.memory_space<vmem>>, %arg8: memref<128x256xbf16, #tpu.memory_space<vmem>>, %arg9: memref<1x256xf32, #tpu.memory_space<vmem>>, %arg10: memref<8x256xf32, #tpu.memory_space<vmem>>, %arg11: memref<8x256xf32, #tpu.memory_space<vmem>>) attributes {dimension_semantics = [#tpu.dimension_semantics<parallel>], iteration_bounds = array<i64: 1>, scalar_prefetch = 0 : i64, scratch_operands = 0 : i64, tpu.core_type = #tpu.core_type<tc>, window_params = [{transform_indices = @transform_0, window_bounds = array<i64: 8, 256>}, {pipeline_mode = #tpu.pipeline_mode<synchronous>, transform_indices = @transform_1, window_bounds = array<i64: 256, 128>}, {pipeline_mode = #tpu.pipeline_mode<synchronous>, transform_indices = @transform_2, window_bounds = array<i64: 1, 128>}, {pipeline_mode = #tpu.pipeline_mode<synchronous>, transform_indices = @transform_3, window_bounds = array<i64: 128, 128>}, {pipeline_mode = #tpu.pipeline_mode<synchronous>, transform_indices = @transform_4, window_bounds = array<i64: 1, 128>}, {pipeline_mode = #tpu.pipeline_mode<synchronous>, transform_indices = @transform_5, window_bounds = array<i64: 128, 256>}, {pipeline_mode = #tpu.pipeline_mode<synchronous>, transform_indices = @transform_6, window_bounds = array<i64: 1, 256>}, {pipeline_mode = #tpu.pipeline_mode<synchronous>, transform_indices = @transform_7, window_bounds = array<i64: 128, 256>}, {pipeline_mode = #tpu.pipeline_mode<synchronous>, transform_indices = @transform_8, window_bounds = array<i64: 1, 256>}, {transform_indices = @transform_9, window_bounds = array<i64: 8, 256>}, {transform_indices = @transform_10, window_bounds = array<i64: 8, 256>}]} {
    %c0 = arith.constant 0 : index
    %c0_0 = arith.constant 0 : index
    %0 = vector.load %arg1[%c0, %c0_0] : memref<8x256xbf16, #tpu.memory_space<vmem>>, vector<8x256xbf16>
    %c0_1 = arith.constant 0 : index
    %c0_2 = arith.constant 0 : index
    %1 = vector.load %arg2[%c0_1, %c0_2] : memref<256x128xbf16, #tpu.memory_space<vmem>>, vector<256x128xbf16>
    %cst = arith.constant dense<0.000000e+00> : vector<8x128xf32>
    %2 = tpu.matmul %0, %1, %cst {dimension_numbers = #tpu.dot_dimension_numbers<[1], [0], [0], [1], [0, 0, 1, 1], [], []>} : vector<8x256xbf16>, vector<256x128xbf16>, vector<8x128xf32> -> vector<8x128xf32>
    %c0_3 = arith.constant 0 : index
    %c0_4 = arith.constant 0 : index
    %3 = vector.load %arg3[%c0_3, %c0_4] : memref<1x128xf32, #tpu.memory_space<vmem>>, vector<1x128xf32>
    %4 = vector.broadcast %3 : vector<1x128xf32> to vector<8x128xf32>
    %5 = arith.addf %2, %4 : vector<8x128xf32>
    %cst_5 = arith.constant 0.000000e+00 : f32
    %6 = vector.broadcast %cst_5 : f32 to vector<8x128xf32>
    %7 = arith.maximumf %5, %6 : vector<8x128xf32>
    %8 = math.absf %5 : vector<8x128xf32>
    %cst_6 = arith.constant 0.000000e+00 : f32
    %9 = vector.broadcast %cst_6 : f32 to vector<8x128xf32>
    %10 = arith.subf %9, %8 : vector<8x128xf32>
    %11 = math.exp %10 : vector<8x128xf32>
    %12 = math.log1p %11 : vector<8x128xf32>
    %13 = arith.addf %7, %12 : vector<8x128xf32>
    %14 = arith.truncf %13 : vector<8x128xf32> to vector<8x128xbf16>
    %c0_7 = arith.constant 0 : index
    %c0_8 = arith.constant 0 : index
    %15 = vector.load %arg4[%c0_7, %c0_8] : memref<128x128xbf16, #tpu.memory_space<vmem>>, vector<128x128xbf16>
    %cst_9 = arith.constant dense<0.000000e+00> : vector<8x128xf32>
    %16 = tpu.matmul %14, %15, %cst_9 {dimension_numbers = #tpu.dot_dimension_numbers<[1], [0], [0], [1], [0, 0, 1, 1], [], []>} : vector<8x128xbf16>, vector<128x128xbf16>, vector<8x128xf32> -> vector<8x128xf32>
    %c0_10 = arith.constant 0 : index
    %c0_11 = arith.constant 0 : index
    %17 = vector.load %arg5[%c0_10, %c0_11] : memref<1x128xf32, #tpu.memory_space<vmem>>, vector<1x128xf32>
    %18 = vector.broadcast %17 : vector<1x128xf32> to vector<8x128xf32>
    %19 = arith.addf %16, %18 : vector<8x128xf32>
    %cst_12 = arith.constant 0.000000e+00 : f32
    %20 = vector.broadcast %cst_12 : f32 to vector<8x128xf32>
    %21 = arith.maximumf %19, %20 : vector<8x128xf32>
    %22 = math.absf %19 : vector<8x128xf32>
    %cst_13 = arith.constant 0.000000e+00 : f32
    %23 = vector.broadcast %cst_13 : f32 to vector<8x128xf32>
    %24 = arith.subf %23, %22 : vector<8x128xf32>
    %25 = math.exp %24 : vector<8x128xf32>
    %26 = math.log1p %25 : vector<8x128xf32>
    %27 = arith.addf %21, %26 : vector<8x128xf32>
    %28 = arith.truncf %27 : vector<8x128xf32> to vector<8x128xbf16>
    %c0_14 = arith.constant 0 : index
    %c0_15 = arith.constant 0 : index
    %29 = vector.load %arg6[%c0_14, %c0_15] : memref<128x256xbf16, #tpu.memory_space<vmem>>, vector<128x256xbf16>
    %cst_16 = arith.constant dense<0.000000e+00> : vector<8x256xf32>
    %30 = tpu.matmul %28, %29, %cst_16 {dimension_numbers = #tpu.dot_dimension_numbers<[1], [0], [0], [1], [0, 0, 1, 1], [], []>} : vector<8x128xbf16>, vector<128x256xbf16>, vector<8x256xf32> -> vector<8x256xf32>
    %c0_17 = arith.constant 0 : index
    %c0_18 = arith.constant 0 : index
    %31 = vector.load %arg7[%c0_17, %c0_18] : memref<1x256xf32, #tpu.memory_space<vmem>>, vector<1x256xf32>
    %32 = vector.broadcast %31 : vector<1x256xf32> to vector<8x256xf32>
    %33 = arith.addf %30, %32 : vector<8x256xf32>
    %c0_19 = arith.constant 0 : index
    %c0_20 = arith.constant 0 : index
    %34 = vector.load %arg11[%c0_19, %c0_20] : memref<8x256xf32, #tpu.memory_space<vmem>>, vector<8x256xf32>
    tpu.vector_store %arg11[%c0_19, %c0_20], %33 {strides = array<i32>} : memref<8x256xf32, #tpu.memory_space<vmem>>, vector<8x256xf32>,
    %35 = vector.extract_strided_slice %33 {offsets = [0, 0], sizes = [8, 128], strides = [1, 1]} : vector<8x256xf32> to vector<8x128xf32>
    %36 = vector.extract_strided_slice %33 {offsets = [0, 128], sizes = [8, 128], strides = [1, 1]} : vector<8x256xf32> to vector<8x128xf32>
    %37 = math.exp %36 : vector<8x128xf32>
    %cst_21 = arith.constant 5.000000e-01 : f32
    %38 = vector.broadcast %cst_21 : f32 to vector<8x128xf32>
    %39 = arith.mulf %38, %37 : vector<8x128xf32>
    %40 = arith.addf %35, %39 : vector<8x128xf32>
    %41 = math.exp %40 : vector<8x128xf32>
    %cst_22 = arith.constant dense<0.000000e+00> : vector<8xf32>
    %42 = vector.multi_reduction <add>, %41, %cst_22 [1] : vector<8x128xf32> to vector<8xf32>
    %43 = vector.shape_cast %42 : vector<8xf32> to vector<8x1xf32>
    %44 = tpu.reciprocal %43 {approx = true} : vector<8x1xf32> -> vector<8x1xf32>
    %45 = vector.broadcast %44 : vector<8x1xf32> to vector<8x128xf32>
    %46 = arith.mulf %41, %45 : vector<8x128xf32>
    %47 = arith.truncf %46 : vector<8x128xf32> to vector<8x128xbf16>
    %c0_23 = arith.constant 0 : index
    %c0_24 = arith.constant 0 : index
    %48 = vector.load %arg8[%c0_23, %c0_24] : memref<128x256xbf16, #tpu.memory_space<vmem>>, vector<128x256xbf16>
    %cst_25 = arith.constant dense<0.000000e+00> : vector<8x256xf32>
    %49 = tpu.matmul %47, %48, %cst_25 {dimension_numbers = #tpu.dot_dimension_numbers<[1], [0], [0], [1], [0, 0, 1, 1], [], []>} : vector<8x128xbf16>, vector<128x256xbf16>, vector<8x256xf32> -> vector<8x256xf32>
    %c0_26 = arith.constant 0 : index
    %c0_27 = arith.constant 0 : index
    %50 = vector.load %arg9[%c0_26, %c0_27] : memref<1x256xf32, #tpu.memory_space<vmem>>, vector<1x256xf32>
    %51 = vector.broadcast %50 : vector<1x256xf32> to vector<8x256xf32>
    %52 = arith.addf %49, %51 : vector<8x256xf32>
    %cst_28 = arith.constant dense<0xFF800000> : vector<8xf32>
    %53 = vector.multi_reduction <maximumf>, %52, %cst_28 [1] : vector<8x256xf32> to vector<8xf32>
    %54 = vector.shape_cast %53 : vector<8xf32> to vector<8x1xf32>
    %55 = vector.broadcast %54 : vector<8x1xf32> to vector<8x256xf32>
    %56 = arith.subf %52, %55 : vector<8x256xf32>
    %c0_29 = arith.constant 0 : index
    %c0_30 = arith.constant 0 : index
    %57 = vector.load %arg10[%c0_29, %c0_30] : memref<8x256xf32, #tpu.memory_space<vmem>>, vector<8x256xf32>
    tpu.vector_store %arg10[%c0_29, %c0_30], %56 {strides = array<i32>} : memref<8x256xf32, #tpu.memory_space<vmem>>, vector<8x256xf32>,
    %58 = math.exp %56 : vector<8x256xf32>
    %cst_31 = arith.constant dense<0.000000e+00> : vector<8xf32>
    %59 = vector.multi_reduction <add>, %58, %cst_31 [1] : vector<8x256xf32> to vector<8xf32>
    %60 = vector.shape_cast %59 : vector<8xf32> to vector<8x1xf32>
    %61 = math.log %60 : vector<8x1xf32>
    %c0_32 = arith.constant 0 : index
    %c0_33 = arith.constant 0 : index
    %62 = vector.load %arg10[%c0_32, %c0_33] : memref<8x256xf32, #tpu.memory_space<vmem>>, vector<8x256xf32>
    %63 = vector.broadcast %61 : vector<8x1xf32> to vector<8x256xf32>
    %64 = arith.subf %62, %63 : vector<8x256xf32>
    %c0_34 = arith.constant 0 : index
    %c0_35 = arith.constant 0 : index
    %65 = vector.load %arg10[%c0_34, %c0_35] : memref<8x256xf32, #tpu.memory_space<vmem>>, vector<8x256xf32>
    tpu.vector_store %arg10[%c0_34, %c0_35], %64 {strides = array<i32>} : memref<8x256xf32, #tpu.memory_space<vmem>>, vector<8x256xf32>,
    return
  }
  func.func @transform_0(%arg0: i32) -> (i32, i32) {
    %c0_i32 = arith.constant 0 : i32
    %c0_i32_0 = arith.constant 0 : i32
    return %arg0, %c0_i32 : i32, i32
  }
  func.func @transform_1(%arg0: i32) -> (i32, i32) {
    %c0_i32 = arith.constant 0 : i32
    %c0_i32_0 = arith.constant 0 : i32
    %c0_i32_1 = arith.constant 0 : i32
    return %c0_i32, %c0_i32_0 : i32, i32
  }
  func.func @transform_2(%arg0: i32) -> (i32, i32) {
    %c0_i32 = arith.constant 0 : i32
    %c0_i32_0 = arith.constant 0 : i32
    %c0_i32_1 = arith.constant 0 : i32
    return %c0_i32, %c0_i32_0 : i32, i32
  }
  func.func @transform_3(%arg0: i32) -> (i32, i32) {
    %c0_i32 = arith.constant 0 : i32
    %c0_i32_0 = arith.constant 0 : i32
    %c0_i32_1 = arith.constant 0 : i32
    return %c0_i32, %c0_i32_0 : i32, i32
  }
  func.func @transform_4(%arg0: i32) -> (i32, i32) {
    %c0_i32 = arith.constant 0 : i32
    %c0_i32_0 = arith.constant 0 : i32
    %c0_i32_1 = arith.constant 0 : i32
    return %c0_i32, %c0_i32_0 : i32, i32
  }
  func.func @transform_5(%arg0: i32) -> (i32, i32) {
    %c0_i32 = arith.constant 0 : i32
    %c0_i32_0 = arith.constant 0 : i32
    %c0_i32_1 = arith.constant 0 : i32
    return %c0_i32, %c0_i32_0 : i32, i32
  }
  func.func @transform_6(%arg0: i32) -> (i32, i32) {
    %c0_i32 = arith.constant 0 : i32
    %c0_i32_0 = arith.constant 0 : i32
    %c0_i32_1 = arith.constant 0 : i32
    return %c0_i32, %c0_i32_0 : i32, i32
  }
  func.func @transform_7(%arg0: i32) -> (i32, i32) {
    %c0_i32 = arith.constant 0 : i32
    %c0_i32_0 = arith.constant 0 : i32
    %c0_i32_1 = arith.constant 0 : i32
    return %c0_i32, %c0_i32_0 : i32, i32
  }
  func.func @transform_8(%arg0: i32) -> (i32, i32) {
    %c0_i32 = arith.constant 0 : i32
    %c0_i32_0 = arith.constant 0 : i32
    %c0_i32_1 = arith.constant 0 : i32
    return %c0_i32, %c0_i32_0 : i32, i32
  }
  func.func @transform_9(%arg0: i32) -> (i32, i32) {
    %c0_i32 = arith.constant 0 : i32
    %c0_i32_0 = arith.constant 0 : i32
    return %arg0, %c0_i32 : i32, i32
  }
  func.func @transform_10(%arg0: i32) -> (i32, i32) {
    %c0_i32 = arith.constant 0 : i32
    %c0_i32_0 = arith.constant 0 : i32
    return %arg0, %c0_i32 : i32, i32
  }
}

</mosaic_0001>

<llo_original>
// kernel: tpu_custom_call.1
$region0: #{tpu_custom_call.1}
  #allocation0 [shape = 'u32[]', space=smem, size = 0x4, offset = 0x4, fixed_abs, tag = 'smem constant byte address 0x4 - core index']
  #allocation1 [shape = 'u32[72,128]{1,0:T(1,128)}', space=vmem, size = 0x9000, scoped, tag = 'internal scratch']
  %s0 = inlined_call_operand.hbm [shape: bf16[8,256], index: 0, kind: input, shape index: {}]
  %s1 = inlined_call_operand.hbm [shape: bf16[256,128], index: 1, kind: input, shape index: {}]
  %s2 = inlined_call_operand.hbm [shape: f32[1,128], index: 2, kind: input, shape index: {}]
  %s3 = inlined_call_operand.hbm [shape: bf16[128,128], index: 3, kind: input, shape index: {}]
  %s4 = inlined_call_operand.hbm [shape: f32[1,128], index: 4, kind: input, shape index: {}]
  %s5 = inlined_call_operand.hbm [shape: bf16[128,256], index: 5, kind: input, shape index: {}]
  %s6 = inlined_call_operand.vmem [shape: f32[1,256], index: 6, kind: input, shape index: {}]
  %s7 = inlined_call_operand.hbm [shape: bf16[128,256], index: 7, kind: input, shape index: {}]
  %s8 = inlined_call_operand.vmem [shape: f32[1,256], index: 8, kind: input, shape index: {}]
  %s9 = inlined_call_operand.hbm [shape: f32[8,256], index: 9, kind: output, shape index: {0}]
  %s10 = inlined_call_operand.hbm [shape: f32[8,256], index: 10, kind: output, shape index: {1}]
  %11 = xla_tuple %s9, %s10
  %s12 = sld [smem:[#allocation0]]
  $region82: #{tpu_custom_call.1} parent=0
    _
  %s14 = ssub.s32 1, %s12
  %s15 = scalar_select 0, %s14, %s12
  $region1: #{tpu_custom_call.1} parent=0
    #allocation2 [shape = 'u8[4096]{0}', space=vmem, size = 0x1000, scoped, tag = 'input window, operand 0, single buffered']
    #allocation3 [shape = 's32[1]{0}', space=sflag, size = 0x4, scoped, tag = 'scoped memory for tpu_custom_call.1']
    #allocation4 [shape = 's32[1]{0}', space=sflag, size = 0x4, scoped, tag = 'scoped memory for tpu_custom_call.1']
    #allocation5 [shape = 'u8[65536]{0}', space=vmem, size = 0x10000, scoped, tag = 'input window, operand 1, single buffered']
    #allocation6 [shape = 's32[1]{0}', space=sflag, size = 0x4, scoped, tag = 'scoped memory for tpu_custom_call.1']
    #allocation7 [shape = 'u8[512]{0}', space=vmem, size = 0x400, scoped, tag = 'input window, operand 2, single buffered']
    #allocation8 [shape = 'u8[32768]{0}', space=vmem, size = 0x8000, scoped, tag = 'input window, operand 3, single buffered']
    #allocation9 [shape = 's32[1]{0}', space=sflag, size = 0x4, scoped, tag = 'scoped memory for tpu_custom_call.1']
    #allocation10 [shape = 'u8[512]{0}', space=vmem, size = 0x400, scoped, tag = 'input window, operand 4, single buffered']
    #allocation11 [shape = 'u8[65536]{0}', space=vmem, size = 0x10000, scoped, tag = 'input window, operand 5, single buffered']
    #allocation12 [shape = 's32[1]{0}', space=sflag, size = 0x4, scoped, tag = 'scoped memory for tpu_custom_call.1']
    #allocation13 [shape = 'u8[65536]{0}', space=vmem, size = 0x10000, scoped, tag = 'input window, operand 7, single buffered']
    #allocation14 [shape = 'u8[8192]{0}', space=vmem, size = 0x2000, scoped, tag = 'output window, operand 0, single buffered']
    #allocation15 [shape = 'u8[8192]{0}', space=vmem, size = 0x2000, scoped, tag = 'output window, operand 1, single buffered']
    #allocation16 [shape = 's32[1]{0}', space=sflag, size = 0x4, scoped, tag = 'scoped memory for tpu_custom_call.1']
    %16 = vsyncpa [#allocation3], 0
    %17 = vsyncpa [#allocation6], 0
    %18 = vsyncpa [#allocation9], 0
    %19 = vsyncpa [#allocation12], 0
    %20 = vsyncpa [#allocation4], 0
    %21 = vsyncpa [#allocation16], 0
    // Predicated region
    $region2: #{tpu_custom_call.1} parent=1 // pred_check
      _
    $region3: #{tpu_custom_call.1} parent=1 // pred_check_branch
      %23 = sbr.rel (0) target = $region5
    $region4: #{tpu_custom_call.1} parent=1 // pred_region
      %25 = vsyncadd [#allocation3], 0
      %s27 = sshll.u32 %s0, 4
      %s28 = int_to_ptr.hbm [resolvable:$true] %s27
      %s29 = sshll.u32 [#allocation2], 4
      %s30 = int_to_ptr.vmem [resolvable:$true] %s29
      %32 = dma.hbm_to_vmem [thread:$0]  %s28, 128, %s30, [#allocation3]
    $region5: #{tpu_custom_call.1} parent=1 // pred_fallthru
      _
    // Predicated region
    $region6: #{tpu_custom_call.1} parent=1 // pred_check
      _
    $region7: #{tpu_custom_call.1} parent=1 // pred_check_branch
      %34 = sbr.rel (0) target = $region9
    $region8: #{tpu_custom_call.1} parent=1 // pred_region
      %36 = vsyncadd [#allocation6], 0
      %s37 = sshll.u32 %s1, 4
      %s38 = int_to_ptr.hbm [resolvable:$true] %s37
      %s39 = sshll.u32 [#allocation5], 4
      %s40 = int_to_ptr.vmem [resolvable:$true] %s39
      %45 = dma.hbm_to_vmem [thread:$0]  %s38, 2048, %s40, [#allocation6], 64, 64, 4
    $region9: #{tpu_custom_call.1} parent=1 // pred_fallthru
      _
    // Predicated region
    $region10: #{tpu_custom_call.1} parent=1 // pred_check
      _
    $region11: #{tpu_custom_call.1} parent=1 // pred_check_branch
      %47 = sbr.rel (0) target = $region13
    $region12: #{tpu_custom_call.1} parent=1 // pred_region
      %49 = vsyncadd [#allocation6], 0
      %s51 = sshll.u32 %s2, 4
      %s52 = int_to_ptr.hbm [resolvable:$true] %s51
      %s53 = sshll.u32 [#allocation7], 4
      %s54 = int_to_ptr.vmem [resolvable:$true] %s53
      %56 = dma.hbm_to_vmem [thread:$0]  %s52, 16, %s54, [#allocation6]
    $region13: #{tpu_custom_call.1} parent=1 // pred_fallthru
      _
    // Predicated region
    $region14: #{tpu_custom_call.1} parent=1 // pred_check
      _
    $region15: #{tpu_custom_call.1} parent=1 // pred_check_branch
      %58 = sbr.rel (0) target = $region17
    $region16: #{tpu_custom_call.1} parent=1 // pred_region
      %60 = vsyncadd [#allocation9], 0
      %s61 = sshll.u32 %s3, 4
      %s62 = int_to_ptr.hbm [resolvable:$true] %s61
      %s63 = sshll.u32 [#allocation8], 4
      %s64 = int_to_ptr.vmem [resolvable:$true] %s63
      %69 = dma.hbm_to_vmem [thread:$0]  %s62, 1024, %s64, [#allocation9], 64, 64, 4
    $region17: #{tpu_custom_call.1} parent=1 // pred_fallthru
      _
    // Predicated region
    $region18: #{tpu_custom_call.1} parent=1 // pred_check
      _
    $region19: #{tpu_custom_call.1} parent=1 // pred_check_branch
      %71 = sbr.rel (0) target = $region21
    $region20: #{tpu_custom_call.1} parent=1 // pred_region
      %73 = vsyncadd [#allocation9], 0
      %s75 = sshll.u32 %s4, 4
      %s76 = int_to_ptr.hbm [resolvable:$true] %s75
      %s77 = sshll.u32 [#allocation10], 4
      %s78 = int_to_ptr.vmem [resolvable:$true] %s77
      %80 = dma.hbm_to_vmem [thread:$0]  %s76, 16, %s78, [#allocation9]
    $region21: #{tpu_custom_call.1} parent=1 // pred_fallthru
      _
    // Predicated region
    $region22: #{tpu_custom_call.1} parent=1 // pred_check
      _
    $region23: #{tpu_custom_call.1} parent=1 // pred_check_branch
      %82 = sbr.rel (0) target = $region25
    $region24: #{tpu_custom_call.1} parent=1 // pred_region
      %84 = vsyncadd [#allocation12], 0
      %s85 = sshll.u32 %s5, 4
      %s86 = int_to_ptr.hbm [resolvable:$true] %s85
      %s87 = sshll.u32 [#allocation11], 4
      %s88 = int_to_ptr.vmem [resolvable:$true] %s87
      %93 = dma.hbm_to_vmem [thread:$0]  %s86, 2048, %s88, [#allocation12], 128, 128, 8
    $region25: #{tpu_custom_call.1} parent=1 // pred_fallthru
      _
    // Predicated region
    $region26: #{tpu_custom_call.1} parent=1 // pred_check
      _
    $region27: #{tpu_custom_call.1} parent=1 // pred_check_branch
      %95 = sbr.rel (0) target = $region29
    $region28: #{tpu_custom_call.1} parent=1 // pred_region
      _
    $region29: #{tpu_custom_call.1} parent=1 // pred_fallthru
      _
    // Predicated region
    $region30: #{tpu_custom_call.1} parent=1 // pred_check
      _
    $region31: #{tpu_custom_call.1} parent=1 // pred_check_branch
      %97 = sbr.rel (0) target = $region33
    $region32: #{tpu_custom_call.1} parent=1 // pred_region
      %99 = vsyncadd [#allocation12], 0
      %s100 = sshll.u32 %s7, 4
      %s101 = int_to_ptr.hbm [resolvable:$true] %s100
      %s102 = sshll.u32 [#allocation13], 4
      %s103 = int_to_ptr.vmem [resolvable:$true] %s102
      %108 = dma.hbm_to_vmem [thread:$0]  %s101, 2048, %s103, [#allocation12], 128, 128, 8
    $region33: #{tpu_custom_call.1} parent=1 // pred_fallthru
      _
    // Predicated region
    $region34: #{tpu_custom_call.1} parent=1 // pred_check
      _
    $region35: #{tpu_custom_call.1} parent=1 // pred_check_branch
      %110 = sbr.rel (0) target = $region37
    $region36: #{tpu_custom_call.1} parent=1 // pred_region
      _
    $region37: #{tpu_custom_call.1} parent=1 // pred_fallthru
      _
    // Predicated region
    $region38: #{tpu_custom_call.1} parent=1 // pred_check
      _
    $region39: #{tpu_custom_call.1} parent=1 // pred_check_branch
      %112 = sbr.rel (0) target = $region41
    $region40: #{tpu_custom_call.1} parent=1 // pred_region
      %114 = dma.done [#allocation3], 128
    $region41: #{tpu_custom_call.1} parent=1 // pred_fallthru
      _
    // Predicated region
    $region42: #{tpu_custom_call.1} parent=1 // pred_check
      _
    $region43: #{tpu_custom_call.1} parent=1 // pred_check_branch
      %116 = sbr.rel (0) target = $region45
    $region44: #{tpu_custom_call.1} parent=1 // pred_region
      %118 = dma.done [#allocation6], 2048
    $region45: #{tpu_custom_call.1} parent=1 // pred_fallthru
      _
    // Predicated region
    $region46: #{tpu_custom_call.1} parent=1 // pred_check
      _
    $region47: #{tpu_custom_call.1} parent=1 // pred_check_branch
      %120 = sbr.rel (0) target = $region49
    $region48: #{tpu_custom_call.1} parent=1 // pred_region
      %122 = dma.done [#allocation6], 16
    $region49: #{tpu_custom_call.1} parent=1 // pred_fallthru
      _
    // Predicated region
    $region50: #{tpu_custom_call.1} parent=1 // pred_check
      _
    $region51: #{tpu_custom_call.1} parent=1 // pred_check_branch
      %124 = sbr.rel (0) target = $region53
    $region52: #{tpu_custom_call.1} parent=1 // pred_region
      %126 = dma.done [#allocation9], 1024
    $region53: #{tpu_custom_call.1} parent=1 // pred_fallthru
      _
    // Predicated region
    $region54: #{tpu_custom_call.1} parent=1 // pred_check
      _
    $region55: #{tpu_custom_call.1} parent=1 // pred_check_branch
      %128 = sbr.rel (0) target = $region57
    $region56: #{tpu_custom_call.1} parent=1 // pred_region
      %130 = dma.done [#allocation9], 16
    $region57: #{tpu_custom_call.1} parent=1 // pred_fallthru
      _
    // Predicated region
    $region58: #{tpu_custom_call.1} parent=1 // pred_check
      _
    $region59: #{tpu_custom_call.1} parent=1 // pred_check_branch
      %132 = sbr.rel (0) target = $region61
    $region60: #{tpu_custom_call.1} parent=1 // pred_region
      %134 = dma.done [#allocation12], 2048
    $region61: #{tpu_custom_call.1} parent=1 // pred_fallthru
      _
    // Predicated region
    $region62: #{tpu_custom_call.1} parent=1 // pred_check
      _
    $region63: #{tpu_custom_call.1} parent=1 // pred_check_branch
      %136 = sbr.rel (0) target = $region65
    $region64: #{tpu_custom_call.1} parent=1 // pred_region
      %138 = dma.done [#allocation12], 2048
    $region65: #{tpu_custom_call.1} parent=1 // pred_fallthru
      _
    %v139 = vld [vmem:[#allocation2] sm:$0xff]
    %v140 = vld [vmem:[#allocation5] sm:$0xf]
    %v141 = vld [vmem:[#allocation5 + $0x4] sm:$0xf]
    %v142 = vld [vmem:[#allocation5 + $0x8] sm:$0xf]
    %v143 = vld [vmem:[#allocation5 + $0xc] sm:$0xf]
    %v144 = vld [vmem:[#allocation5 + $0x10] sm:$0xf]
    %v145 = vld [vmem:[#allocation5 + $0x14] sm:$0xf]
    %v146 = vld [vmem:[#allocation5 + $0x18] sm:$0xf]
    %v147 = vld [vmem:[#allocation5 + $0x1c] sm:$0xf]
    %v148 = vld [vmem:[#allocation5 + $0x20] sm:$0xf]
    %v149 = vld [vmem:[#allocation5 + $0x24] sm:$0xf]
    %v150 = vld [vmem:[#allocation5 + $0x28] sm:$0xf]
    %v151 = vld [vmem:[#allocation5 + $0x2c] sm:$0xf]
    %v152 = vld [vmem:[#allocation5 + $0x30] sm:$0xf]
    %v153 = vld [vmem:[#allocation5 + $0x34] sm:$0xf]
    %v154 = vld [vmem:[#allocation5 + $0x38] sm:$0xf]
    %v155 = vld [vmem:[#allocation5 + $0x3c] sm:$0xf]
    %v156 = vld [vmem:[#allocation5 + $0x40] sm:$0xf]
    %v157 = vld [vmem:[#allocation5 + $0x44] sm:$0xf]
    %v158 = vld [vmem:[#allocation5 + $0x48] sm:$0xf]
    %v159 = vld [vmem:[#allocation5 + $0x4c] sm:$0xf]
    %v160 = vld [vmem:[#allocation5 + $0x50] sm:$0xf]
    %v161 = vld [vmem:[#allocation5 + $0x54] sm:$0xf]
    %v162 = vld [vmem:[#allocation5 + $0x58] sm:$0xf]
    %v163 = vld [vmem:[#allocation5 + $0x5c] sm:$0xf]
    %v164 = vld [vmem:[#allocation5 + $0x60] sm:$0xf]
    %v165 = vld [vmem:[#allocation5 + $0x64] sm:$0xf]
    %v166 = vld [vmem:[#allocation5 + $0x68] sm:$0xf]
    %v167 = vld [vmem:[#allocation5 + $0x6c] sm:$0xf]
    %v168 = vld [vmem:[#allocation5 + $0x70] sm:$0xf]
    %v169 = vld [vmem:[#allocation5 + $0x74] sm:$0xf]
    %v170 = vld [vmem:[#allocation5 + $0x78] sm:$0xf]
    %v171 = vld [vmem:[#allocation5 + $0x7c] sm:$0xf]
    %v172 = vld [vmem:[#allocation7] sm:$0x1]
    %v174 = vperm.slane %v172, 0
    %v177 = vunpack.c.l.b16 %v139
    %v178 = vunpack.c.h.b16 %v139
    %v179 = vpack.c.b16 %v177, %v177
    %v180 = vpack.c.b16 %v178, %v178
    %v215 = vunpack.c.l.b16 %v140
    %v216 = vunpack.c.l.b16 %v141
    %v217 = vunpack.c.l.b16 %v142
    %v218 = vunpack.c.l.b16 %v143
    %v219 = vunpack.c.l.b16 %v144
    %v220 = vunpack.c.l.b16 %v145
    %v221 = vunpack.c.l.b16 %v146
    %v222 = vunpack.c.l.b16 %v147
    %v223 = vunpack.c.l.b16 %v148
    %v224 = vunpack.c.l.b16 %v149
    %v225 = vunpack.c.l.b16 %v150
    %v226 = vunpack.c.l.b16 %v151
    %v227 = vunpack.c.l.b16 %v152
    %v228 = vunpack.c.l.b16 %v153
    %v229 = vunpack.c.l.b16 %v154
    %v230 = vunpack.c.l.b16 %v155
    %v231 = vunpack.c.l.b16 %v156
    %v232 = vunpack.c.l.b16 %v157
    %v233 = vunpack.c.l.b16 %v158
    %v234 = vunpack.c.l.b16 %v159
    %v235 = vunpack.c.l.b16 %v160
    %v236 = vunpack.c.l.b16 %v161
    %v237 = vunpack.c.l.b16 %v162
    %v238 = vunpack.c.l.b16 %v163
    %v239 = vunpack.c.l.b16 %v164
    %v240 = vunpack.c.l.b16 %v165
    %v241 = vunpack.c.l.b16 %v166
    %v242 = vunpack.c.l.b16 %v167
    %v243 = vunpack.c.l.b16 %v168
    %v244 = vunpack.c.l.b16 %v169
    %v245 = vunpack.c.l.b16 %v170
    %v246 = vunpack.c.l.b16 %v171
    %v247 = vpack.c.b16 %v216, %v215
    %v248 = vpack.c.b16 %v218, %v217
    %v249 = vpack.c.b16 %v220, %v219
    %v250 = vpack.c.b16 %v222, %v221
    %v251 = vpack.c.b16 %v224, %v223
    %v252 = vpack.c.b16 %v226, %v225
    %v253 = vpack.c.b16 %v228, %v227
    %v254 = vpack.c.b16 %v230, %v229
    %v255 = vpack.c.b16 %v232, %v231
    %v256 = vpack.c.b16 %v234, %v233
    %v257 = vpack.c.b16 %v236, %v235
    %v258 = vpack.c.b16 %v238, %v237
    %v259 = vpack.c.b16 %v240, %v239
    %v260 = vpack.c.b16 %v242, %v241
    %v261 = vpack.c.b16 %v244, %v243
    %v262 = vpack.c.b16 %v246, %v245
    %279 = vmatpush.bf16.msra.mxu0 %v254
    %280 = vmatpush.bf16.msra.mxu0 %v253
    %281 = vmatpush.bf16.msra.mxu0 %v252
    %282 = vmatpush.bf16.msra.mxu0 %v251
    %283 = vmatpush.bf16.msra.mxu0 %v250
    %284 = vmatpush.bf16.msra.mxu0 %v249
    %285 = vmatpush.bf16.msra.mxu0 %v248
    %286 = vmatpush.bf16.msra.mxu0 %v247
    %287 = vmatmul.bf16.gmra.mxu0 %v179
    %v288 = vpop.f32.mrf.mxu0
    %v289 = vadd.f32 %v174, %v288
    %v290 = vpop.f32.mrf.mxu0
    %291 = vdwg.mxu0
    %292 = vmatpush.bf16.msra.mxu0 %v262
    %293 = vmatpush.bf16.msra.mxu0 %v261
    %294 = vmatpush.bf16.msra.mxu0 %v260
    %295 = vmatpush.bf16.msra.mxu0 %v259
    %296 = vmatpush.bf16.msra.mxu0 %v258
    %297 = vmatpush.bf16.msra.mxu0 %v257
    %298 = vmatpush.bf16.msra.mxu0 %v256
    %299 = vmatpush.bf16.msra.mxu0 %v255
    %300 = vmatmul.bf16.gmra.mxu0 %v180
    %v301 = vpop.f32.mrf.mxu0
    %v302 = vadd.f32 %v289, %v301
    %v303 = vpop.f32.mrf.mxu0
    %304 = vdwg.mxu0
    %v305 = vmax.f32 %v302, 0.0
    %v306 = vand.u32 2147483647, %v302
    %v307 = vsub.f32 0.0, %v306
    %v308 = vmul.f32 %v307, 1.442695
    %v309 = vpow.pop %v308
    %v310 = vadd.f32 %v309, 1.0
    %v311 = vlog2.pop %v310
    %v312 = vmul.f32 %v311, 0.6931472
    %v313 = vmul.f32 -0.5, %v309
    %v314 = vadd.f32 %v313, 1.0
    %v315 = vmul.f32 %v314, %v309
    %v316 = vand.u32 2147483647, %v309
    %vm317 = vcmp.lt.f32.partialorder %v316, 0.0004427343
    %v318 = vsel %vm317, %v315, %v312
    %v319 = vadd.f32 %v305, %v318
    %v320 = vpack.c.bf16 %v319, %v319
    %v321 = vld [vmem:[#allocation8] sm:$0xf]
    %v322 = vld [vmem:[#allocation8 + $0x4] sm:$0xf]
    %v323 = vld [vmem:[#allocation8 + $0x8] sm:$0xf]
    %v324 = vld [vmem:[#allocation8 + $0xc] sm:$0xf]
    %v325 = vld [vmem:[#allocation8 + $0x10] sm:$0xf]
    %v326 = vld [vmem:[#allocation8 + $0x14] sm:$0xf]
    %v327 = vld [vmem:[#allocation8 + $0x18] sm:$0xf]
    %v328 = vld [vmem:[#allocation8 + $0x1c] sm:$0xf]
    %v329 = vld [vmem:[#allocation8 + $0x20] sm:$0xf]
    %v330 = vld [vmem:[#allocation8 + $0x24] sm:$0xf]
    %v331 = vld [vmem:[#allocation8 + $0x28] sm:$0xf]
    %v332 = vld [vmem:[#allocation8 + $0x2c] sm:$0xf]
    %v333 = vld [vmem:[#allocation8 + $0x30] sm:$0xf]
    %v334 = vld [vmem:[#allocation8 + $0x34] sm:$0xf]
    %v335 = vld [vmem:[#allocation8 + $0x38] sm:$0xf]
    %v336 = vld [vmem:[#allocation8 + $0x3c] sm:$0xf]
    %v337 = vld [vmem:[#allocation10] sm:$0x1]
    %v339 = vperm.slane %v337, 0
    %v357 = vunpack.c.l.b16 %v321
    %v358 = vunpack.c.l.b16 %v322
    %v359 = vunpack.c.l.b16 %v323
    %v360 = vunpack.c.l.b16 %v324
    %v361 = vunpack.c.l.b16 %v325
    %v362 = vunpack.c.l.b16 %v326
    %v363 = vunpack.c.l.b16 %v327
    %v364 = vunpack.c.l.b16 %v328
    %v365 = vunpack.c.l.b16 %v329
    %v366 = vunpack.c.l.b16 %v330
    %v367 = vunpack.c.l.b16 %v331
    %v368 = vunpack.c.l.b16 %v332
    %v369 = vunpack.c.l.b16 %v333
    %v370 = vunpack.c.l.b16 %v334
    %v371 = vunpack.c.l.b16 %v335
    %v372 = vunpack.c.l.b16 %v336
    %v373 = vpack.c.b16 %v358, %v357
    %v374 = vpack.c.b16 %v360, %v359
    %v375 = vpack.c.b16 %v362, %v361
    %v376 = vpack.c.b16 %v364, %v363
    %v377 = vpack.c.b16 %v366, %v365
    %v378 = vpack.c.b16 %v368, %v367
    %v379 = vpack.c.b16 %v370, %v369
    %v380 = vpack.c.b16 %v372, %v371
    %389 = vmatpush.bf16.msra.mxu0 %v380
    %390 = vmatpush.bf16.msra.mxu0 %v379
    %391 = vmatpush.bf16.msra.mxu0 %v378
    %392 = vmatpush.bf16.msra.mxu0 %v377
    %393 = vmatpush.bf16.msra.mxu0 %v376
    %394 = vmatpush.bf16.msra.mxu0 %v375
    %395 = vmatpush.bf16.msra.mxu0 %v374
    %396 = vmatpush.bf16.msra.mxu0 %v373
    %397 = vmatmul.bf16.gmra.mxu0 %v320
    %v398 = vpop.f32.mrf.mxu0
    %v399 = vadd.f32 %v339, %v398
    %v400 = vpop.f32.mrf.mxu0
    %401 = vdwg.mxu0
    %v402 = vmax.f32 %v399, 0.0
    %v403 = vand.u32 2147483647, %v399
    %v404 = vsub.f32 0.0, %v403
    %v405 = vmul.f32 %v404, 1.442695
    %v406 = vpow.pop %v405
    %v407 = vadd.f32 %v406, 1.0
    %v408 = vlog2.pop %v407
    %v409 = vmul.f32 %v408, 0.6931472
    %v410 = vmul.f32 -0.5, %v406
    %v411 = vadd.f32 %v410, 1.0
    %v412 = vmul.f32 %v411, %v406
    %v413 = vand.u32 2147483647, %v406
    %vm414 = vcmp.lt.f32.partialorder %v413, 0.0004427343
    %v415 = vsel %vm414, %v412, %v409
    %v416 = vadd.f32 %v402, %v415
    %v417 = vpack.c.bf16 %v416, %v416
    %v418 = vld [vmem:[#allocation11] sm:$0xff]
    %v419 = vld [vmem:[#allocation11 + $0x8] sm:$0xff]
    %v420 = vld [vmem:[#allocation11 + $0x10] sm:$0xff]
    %v421 = vld [vmem:[#allocation11 + $0x18] sm:$0xff]
    %v422 = vld [vmem:[#allocation11 + $0x20] sm:$0xff]
    %v423 = vld [vmem:[#allocation11 + $0x28] sm:$0xff]
    %v424 = vld [vmem:[#allocation11 + $0x30] sm:$0xff]
    %v425 = vld [vmem:[#allocation11 + $0x38] sm:$0xff]
    %v426 = vld [vmem:[#allocation11 + $0x40] sm:$0xff]
    %v427 = vld [vmem:[#allocation11 + $0x48] sm:$0xff]
    %v428 = vld [vmem:[#allocation11 + $0x50] sm:$0xff]
    %v429 = vld [vmem:[#allocation11 + $0x58] sm:$0xff]
    %v430 = vld [vmem:[#allocation11 + $0x60] sm:$0xff]
    %v431 = vld [vmem:[#allocation11 + $0x68] sm:$0xff]
    %v432 = vld [vmem:[#allocation11 + $0x70] sm:$0xff]
    %v433 = vld [vmem:[#allocation11 + $0x78] sm:$0xff]
    %v434 = vld [vmem:[%s6] sm:$0x3]
    %v436 = vperm.slane %v434, 0
    %v437 = vperm.slane %v434, 1
    %v456 = vunpack.c.l.b16 %v418
    %v457 = vunpack.c.h.b16 %v418
    %v458 = vunpack.c.l.b16 %v419
    %v459 = vunpack.c.h.b16 %v419
    %v460 = vunpack.c.l.b16 %v420
    %v461 = vunpack.c.h.b16 %v420
    %v462 = vunpack.c.l.b16 %v421
    %v463 = vunpack.c.h.b16 %v421
    %v464 = vunpack.c.l.b16 %v422
    %v465 = vunpack.c.h.b16 %v422
    %v466 = vunpack.c.l.b16 %v423
    %v467 = vunpack.c.h.b16 %v423
    %v468 = vunpack.c.l.b16 %v424
    %v469 = vunpack.c.h.b16 %v424
    %v470 = vunpack.c.l.b16 %v425
    %v471 = vunpack.c.h.b16 %v425
    %v472 = vunpack.c.l.b16 %v426
    %v473 = vunpack.c.h.b16 %v426
    %v474 = vunpack.c.l.b16 %v427
    %v475 = vunpack.c.h.b16 %v427
    %v476 = vunpack.c.l.b16 %v428
    %v477 = vunpack.c.h.b16 %v428
    %v478 = vunpack.c.l.b16 %v429
    %v479 = vunpack.c.h.b16 %v429
    %v480 = vunpack.c.l.b16 %v430
    %v481 = vunpack.c.h.b16 %v430
    %v482 = vunpack.c.l.b16 %v431
    %v483 = vunpack.c.h.b16 %v431
    %v484 = vunpack.c.l.b16 %v432
    %v485 = vunpack.c.h.b16 %v432
    %v486 = vunpack.c.l.b16 %v433
    %v487 = vunpack.c.h.b16 %v433
    %v488 = vpack.c.b16 %v458, %v456
    %v489 = vpack.c.b16 %v459, %v457
    %v490 = vpack.c.b16 %v462, %v460
    %v491 = vpack.c.b16 %v463, %v461
    %v492 = vpack.c.b16 %v466, %v464
    %v493 = vpack.c.b16 %v467, %v465
    %v494 = vpack.c.b16 %v470, %v468
    %v495 = vpack.c.b16 %v471, %v469
    %v496 = vpack.c.b16 %v474, %v472
    %v497 = vpack.c.b16 %v475, %v473
    %v498 = vpack.c.b16 %v478, %v476
    %v499 = vpack.c.b16 %v479, %v477
    %v500 = vpack.c.b16 %v482, %v480
    %v501 = vpack.c.b16 %v483, %v481
    %v502 = vpack.c.b16 %v486, %v484
    %v503 = vpack.c.b16 %v487, %v485
    %520 = vmatpush.bf16.msra.mxu0 %v502
    %521 = vmatpush.bf16.msra.mxu0 %v500
    %522 = vmatpush.bf16.msra.mxu0 %v498
    %523 = vmatpush.bf16.msra.mxu0 %v496
    %524 = vmatpush.bf16.msra.mxu0 %v494
    %525 = vmatpush.bf16.msra.mxu0 %v492
    %526 = vmatpush.bf16.msra.mxu0 %v490
    %527 = vmatpush.bf16.msra.mxu0 %v488
    %528 = vmatmul.bf16.gmra.mxu0 %v417
    %v529 = vpop.f32.mrf.mxu0
    %v530 = vadd.f32 %v436, %v529
    %v531 = vpop.f32.mrf.mxu0
    %532 = vdwg.mxu0
    %533 = vmatpush.bf16.msra.mxu0 %v503
    %534 = vmatpush.bf16.msra.mxu0 %v501
    %535 = vmatpush.bf16.msra.mxu0 %v499
    %536 = vmatpush.bf16.msra.mxu0 %v497
    %537 = vmatpush.bf16.msra.mxu0 %v495
    %538 = vmatpush.bf16.msra.mxu0 %v493
    %539 = vmatpush.bf16.msra.mxu0 %v491
    %540 = vmatpush.bf16.msra.mxu0 %v489
    %541 = vmatmul.bf16.gmra.mxu0 %v417
    %v542 = vpop.f32.mrf.mxu0
    %v543 = vadd.f32 %v437, %v542
    %v544 = vpop.f32.mrf.mxu0
    %545 = vdwg.mxu0
    %546 = vst [vmem:[#allocation15] sm:$0xff] %v530
    %547 = vst [vmem:[#allocation15 + $0x8] sm:$0xff] %v543
    %v548 = vmul.f32 %v543, 1.442695
    %v549 = vpow.pop %v548
    %v550 = vmul.f32 %v549, 0.5
    %v551 = vadd.f32 %v530, %v550
    %v552 = vmul.f32 %v551, 1.442695
    %v553 = vpow.pop %v552
    %554 = vadd.xlane.f32.xlu0 %v553
    %v555 = vpop.xlane.xlu0 %554
    %v556 = vrcp.pop %v555
    %v557 = vmul.f32 %v553, %v556
    %v558 = vpack.c.bf16 %v557, %v557
    %v559 = vld [vmem:[#allocation13] sm:$0xff]
    %v560 = vld [vmem:[#allocation13 + $0x8] sm:$0xff]
    %v561 = vld [vmem:[#allocation13 + $0x10] sm:$0xff]
    %v562 = vld [vmem:[#allocation13 + $0x18] sm:$0xff]
    %v563 = vld [vmem:[#allocation13 + $0x20] sm:$0xff]
    %v564 = vld [vmem:[#allocation13 + $0x28] sm:$0xff]
    %v565 = vld [vmem:[#allocation13 + $0x30] sm:$0xff]
    %v566 = vld [vmem:[#allocation13 + $0x38] sm:$0xff]
    %v567 = vld [vmem:[#allocation13 + $0x40] sm:$0xff]
    %v568 = vld [vmem:[#allocation13 + $0x48] sm:$0xff]
    %v569 = vld [vmem:[#allocation13 + $0x50] sm:$0xff]
    %v570 = vld [vmem:[#allocation13 + $0x58] sm:$0xff]
    %v571 = vld [vmem:[#allocation13 + $0x60] sm:$0xff]
    %v572 = vld [vmem:[#allocation13 + $0x68] sm:$0xff]
    %v573 = vld [vmem:[#allocation13 + $0x70] sm:$0xff]
    %v574 = vld [vmem:[#allocation13 + $0x78] sm:$0xff]
    %v575 = vld [vmem:[%s8] sm:$0x3]
    %v577 = vperm.slane %v575, 0
    %v578 = vperm.slane %v575, 1
    %v597 = vunpack.c.l.b16 %v559
    %v598 = vunpack.c.h.b16 %v559
    %v599 = vunpack.c.l.b16 %v560
    %v600 = vunpack.c.h.b16 %v560
    %v601 = vunpack.c.l.b16 %v561
    %v602 = vunpack.c.h.b16 %v561
    %v603 = vunpack.c.l.b16 %v562
    %v604 = vunpack.c.h.b16 %v562
    %v605 = vunpack.c.l.b16 %v563
    %v606 = vunpack.c.h.b16 %v563
    %v607 = vunpack.c.l.b16 %v564
    %v608 = vunpack.c.h.b16 %v564
    %v609 = vunpack.c.l.b16 %v565
    %v610 = vunpack.c.h.b16 %v565
    %v611 = vunpack.c.l.b16 %v566
    %v612 = vunpack.c.h.b16 %v566
    %v613 = vunpack.c.l.b16 %v567
    %v614 = vunpack.c.h.b16 %v567
    %v615 = vunpack.c.l.b16 %v568
    %v616 = vunpack.c.h.b16 %v568
    %v617 = vunpack.c.l.b16 %v569
    %v618 = vunpack.c.h.b16 %v569
    %v619 = vunpack.c.l.b16 %v570
    %v620 = vunpack.c.h.b16 %v570
    %v621 = vunpack.c.l.b16 %v571
    %v622 = vunpack.c.h.b16 %v571
    %v623 = vunpack.c.l.b16 %v572
    %v624 = vunpack.c.h.b16 %v572
    %v625 = vunpack.c.l.b16 %v573
    %v626 = vunpack.c.h.b16 %v573
    %v627 = vunpack.c.l.b16 %v574
    %v628 = vunpack.c.h.b16 %v574
    %v629 = vpack.c.b16 %v599, %v597
    %v630 = vpack.c.b16 %v600, %v598
    %v631 = vpack.c.b16 %v603, %v601
    %v632 = vpack.c.b16 %v604, %v602
    %v633 = vpack.c.b16 %v607, %v605
    %v634 = vpack.c.b16 %v608, %v606
    %v635 = vpack.c.b16 %v611, %v609
    %v636 = vpack.c.b16 %v612, %v610
    %v637 = vpack.c.b16 %v615, %v613
    %v638 = vpack.c.b16 %v616, %v614
    %v639 = vpack.c.b16 %v619, %v617
    %v640 = vpack.c.b16 %v620, %v618
    %v641 = vpack.c.b16 %v623, %v621
    %v642 = vpack.c.b16 %v624, %v622
    %v643 = vpack.c.b16 %v627, %v625
    %v644 = vpack.c.b16 %v628, %v626
    %661 = vmatpush.bf16.msra.mxu0 %v643
    %662 = vmatpush.bf16.msra.mxu0 %v641
    %663 = vmatpush.bf16.msra.mxu0 %v639
    %664 = vmatpush.bf16.msra.mxu0 %v637
    %665 = vmatpush.bf16.msra.mxu0 %v635
    %666 = vmatpush.bf16.msra.mxu0 %v633
    %667 = vmatpush.bf16.msra.mxu0 %v631
    %668 = vmatpush.bf16.msra.mxu0 %v629
    %669 = vmatmul.bf16.gmra.mxu0 %v558
    %v670 = vpop.f32.mrf.mxu0
    %v671 = vadd.f32 %v577, %v670
    %v672 = vpop.f32.mrf.mxu0
    %673 = vdwg.mxu0
    %674 = vmatpush.bf16.msra.mxu0 %v644
    %675 = vmatpush.bf16.msra.mxu0 %v642
    %676 = vmatpush.bf16.msra.mxu0 %v640
    %677 = vmatpush.bf16.msra.mxu0 %v638
    %678 = vmatpush.bf16.msra.mxu0 %v636
    %679 = vmatpush.bf16.msra.mxu0 %v634
    %680 = vmatpush.bf16.msra.mxu0 %v632
    %681 = vmatpush.bf16.msra.mxu0 %v630
    %682 = vmatmul.bf16.gmra.mxu0 %v558
    %v683 = vpop.f32.mrf.mxu0
    %v684 = vadd.f32 %v578, %v683
    %v685 = vpop.f32.mrf.mxu0
    %686 = vdwg.mxu0
    %v687 = vmax.f32 %v671, %v684
    %688 = vmax.xlane.f32.xlu0 %v687
    %v689 = vpop.xlane.xlu0 %688
    %v690 = vsub.f32 %v671, %v689
    %v691 = vsub.f32 %v684, %v689
    %692 = vst [vmem:[#allocation14] sm:$0xff] %v690
    %693 = vst [vmem:[#allocation14 + $0x8] sm:$0xff] %v691
    %v694 = vmul.f32 %v690, 1.442695
    %v695 = vpow.pop %v694
    %v696 = vmul.f32 %v691, 1.442695
    %v697 = vpow.pop %v696
    %v698 = vadd.f32 %v695, %v697
    %699 = vadd.xlane.f32.xlu0 %v698
    %v700 = vpop.xlane.xlu0 %699
    %v701 = vlog2.pop %v700
    %v702 = vmul.f32 %v701, 0.6931472
    %v703 = vld [vmem:[#allocation14] sm:$0xff]
    %v704 = vld [vmem:[#allocation14 + $0x8] sm:$0xff]
    %v705 = vsub.f32 %v703, %v702
    %v706 = vsub.f32 %v704, %v702
    %707 = vst [vmem:[#allocation14] sm:$0xff] %v705
    %708 = vst [vmem:[#allocation14 + $0x8] sm:$0xff] %v706
    // Predicated region
    $region66: #{tpu_custom_call.1} parent=1 // pred_check
      _
    $region67: #{tpu_custom_call.1} parent=1 // pred_check_branch
      %710 = sbr.rel (0) target = $region69
    $region68: #{tpu_custom_call.1} parent=1 // pred_region
      %712 = vsyncadd [#allocation4], 0
      %s714 = sshll.u32 [#allocation14], 4
      %s715 = int_to_ptr.vmem [resolvable:$true] %s714
      %s716 = sshll.u32 %s9, 4
      %s717 = int_to_ptr.hbm [resolvable:$true] %s716
      %719 = dma.vmem_to_hbm [thread:$0]  %s715, 256, %s717, [#allocation4]
    $region69: #{tpu_custom_call.1} parent=1 // pred_fallthru
      _
    // Predicated region
    $region70: #{tpu_custom_call.1} parent=1 // pred_check
      _
    $region71: #{tpu_custom_call.1} parent=1 // pred_check_branch
      %721 = sbr.rel (0) target = $region73
    $region72: #{tpu_custom_call.1} parent=1 // pred_region
      %723 = vsyncadd [#allocation16], 0
      %s725 = sshll.u32 [#allocation15], 4
      %s726 = int_to_ptr.vmem [resolvable:$true] %s725
      %s727 = sshll.u32 %s10, 4
      %s728 = int_to_ptr.hbm [resolvable:$true] %s727
      %730 = dma.vmem_to_hbm [thread:$0]  %s726, 256, %s728, [#allocation16]
    $region73: #{tpu_custom_call.1} parent=1 // pred_fallthru
      _
    // Predicated region
    $region74: #{tpu_custom_call.1} parent=1 // pred_check
      _
    $region75: #{tpu_custom_call.1} parent=1 // pred_check_branch
      %732 = sbr.rel (0) target = $region77
    $region76: #{tpu_custom_call.1} parent=1 // pred_region
      %734 = dma.done [#allocation4], 256
    $region77: #{tpu_custom_call.1} parent=1 // pred_fallthru
      _
    // Predicated region
    $region78: #{tpu_custom_call.1} parent=1 // pred_check
      _
    $region79: #{tpu_custom_call.1} parent=1 // pred_check_branch
      %736 = sbr.rel (0) target = $region81
    $region80: #{tpu_custom_call.1} parent=1 // pred_region
      %738 = dma.done [#allocation16], 256
    $region81: #{tpu_custom_call.1} parent=1 // pred_fallthru
      _
    %739 = vsyncpa [#allocation3], 1
    %740 = vsyncpa [#allocation6], 1
    %741 = vsyncpa [#allocation9], 1
    %742 = vsyncpa [#allocation12], 1
    %743 = vsyncpa [#allocation4], 1
    %744 = vsyncpa [#allocation16], 1

</llo_original>
